<compile_context>
chip_gen: v5e
topology: v5e:2x2
jax: 0.10.0
libtpu: 0.0.40
codegen_flags: <defaults>
</compile_context>

<pallas_src>
import functools

import jax
import jax.numpy as jnp
from jax.experimental import pallas as pl
from jax.experimental.pallas import tpu as pltpu

LANE = 128


def _atrous_kernel(x_ref, w_ref, b_ref, o_ref, *, TH, W, Cp, Cop, rate):
    # x_ref : (1, H + 2r, W + 2r, Cp)  bf16  full padded image for this batch
    #         (constant block index along the band axis -> DMA'd once per image)
    # w_ref : (9*Cp, Cop)              bf16  (BN scale folded in)
    # b_ref : (1, Cop)                 f32   (conv bias + BN shift folded in)
    # o_ref : (1, TH, W, Cop)          f32   this band's output rows
    band = pl.program_id(1)
    r0 = pl.multiple_of(band * TH, TH)                  # band origin in padded image
    xp = x_ref[0, pl.ds(r0, TH + 2 * rate), :, :]       # (TH+2r, W+2r, Cp) bf16

    # im2col: gather the 9 dilated taps along the lane axis -> one MXU matmul.
    cols = []
    for ky in range(3):                                 # static unroll
        for kx in range(3):
            win = xp[ky * rate:ky * rate + TH, kx * rate:kx * rate + W, :]
            cols.append(win.reshape(TH * W, Cp))
    patch = jnp.concatenate(cols, axis=-1)              # (TH*W, 9*Cp) bf16

    acc = jnp.dot(patch, w_ref[...],
                  preferred_element_type=jnp.float32)   # (TH*W, Cop) f32
    out = acc + b_ref[...]                              # folded conv-bias + BN
    o_ref[0] = out.reshape(TH, W, Cop).astype(o_ref.dtype)


def atrous_module_forward(x_nchw, params, *, rate, eps=1e-5, band_h=8):
    """PyTorch-equivalent forward. x_nchw: (N, C_in, H, W) f32 -> (N, C_out, H, W) f32."""
    w_hwio, b_conv, gamma, beta, mean, var = params
    N, C_in, H, W = x_nchw.shape
    C_out = w_hwio.shape[-1]
    if H % band_h != 0:
        band_h = H                                      # fallback: whole image per step
    nb = H // band_h

    Cp = ((C_in + LANE - 1) // LANE) * LANE             # lane-padded channels
    Cop = ((C_out + LANE - 1) // LANE) * LANE

    # ---- fold inference BatchNorm + conv bias into weight / bias ----
    scale = gamma / jnp.sqrt(var + eps)                         # (C_out,)
    w_f = w_hwio * scale                                        # (3,3,Cin,Cout)
    b_f = (b_conv - mean) * scale + beta                        # (C_out,)

    w_p = jnp.zeros((3, 3, Cp, Cop), jnp.float32).at[:, :, :C_in, :C_out].set(w_f)
    w_p = w_p.reshape(9 * Cp, Cop).astype(jnp.bfloat16)         # matches patch order
    b_p = jnp.zeros((1, Cop), jnp.float32).at[0, :C_out].set(b_f)

    # ---- layout plumbing: NCHW -> NHWC, lane-pad channels, spatial halo, bf16 ----
    x = jnp.transpose(x_nchw, (0, 2, 3, 1))                     # (N,H,W,Cin)
    x = jnp.pad(x, ((0, 0), (0, 0), (0, 0), (0, Cp - C_in)))
    x = jnp.pad(x, ((0, 0), (rate, rate), (rate, rate), (0, 0))).astype(jnp.bfloat16)
    Hp, Wp = H + 2 * rate, W + 2 * rate                         # (N, Hp, Wp, Cp)

    kernel = functools.partial(_atrous_kernel,
                               TH=band_h, W=W, Cp=Cp, Cop=Cop, rate=rate)

    out = pl.pallas_call(
        kernel,
        out_shape=jax.ShapeDtypeStruct((N, H, W, Cop), jnp.float32),
        grid=(N, nb),
        in_specs=[
            # Full padded image; block index constant over the band axis -> the
            # pipeline skips the re-DMA for consecutive bands of the same image.
            pl.BlockSpec((1, Hp, Wp, Cp), lambda n, b: (n, 0, 0, 0)),
            pl.BlockSpec((9 * Cp, Cop), lambda n, b: (0, 0)),
            pl.BlockSpec((1, Cop), lambda n, b: (0, 0)),
        ],
        out_specs=pl.BlockSpec((1, band_h, W, Cop), lambda n, b: (n, b, 0, 0)),
        compiler_params=pltpu.CompilerParams(
            dimension_semantics=("parallel", "arbitrary"),
            vmem_limit_bytes=64 * 1024 * 1024),
    )(x, w_p, b_p)

    # strip channel padding, back to NCHW
    return jnp.transpose(out[..., :C_out], (0, 3, 1, 2))


def make_params(key, inplanes, planes):
    """Deterministic conv weight/bias + BatchNorm running stats."""
    k = jax.random.split(key, 6)
    w = jax.random.normal(k[0], (3, 3, inplanes, planes), jnp.float32) * 0.1  # HWIO
    b = 0.1 * jax.random.normal(k[1], (planes,), jnp.float32)
    gamma = 1.0 + 0.1 * jax.random.normal(k[2], (planes,), jnp.float32)
    beta = 0.1 * jax.random.normal(k[3], (planes,), jnp.float32)
    mean = 0.1 * jax.random.normal(k[4], (planes,), jnp.float32)
    var = jax.random.uniform(k[5], (planes,), jnp.float32, 0.5, 1.5)
    return w, b, gamma, beta, mean, var


def reference_nchw(x_nchw, params, *, rate, eps=1e-5):
    """Pure-JAX f32 reference matching the PyTorch module (eval-mode BN)."""
    w_hwio, b_conv, gamma, beta, mean, var = params
    x = jnp.transpose(x_nchw, (0, 2, 3, 1))
    y = jax.lax.conv_general_dilated(
        x, w_hwio, (1, 1), ((rate, rate), (rate, rate)),
        rhs_dilation=(rate, rate),
        dimension_numbers=("NHWC", "HWIO", "NHWC"))
    y = y + b_conv
    y = (y - mean) / jnp.sqrt(var + eps) * gamma + beta
    return jnp.transpose(y, (0, 3, 1, 2))


if __name__ == "__main__":
    # Module config: Atrous_module(inplanes=16, planes=8, rate=2); input 2x16x16x16 (NCHW).
    inplanes, planes, rate = 16, 8, 2
    N, H, W = 2, 16, 16

    key = jax.random.PRNGKey(0)
    kx, kp = jax.random.split(key)
    x_nchw = jax.random.normal(kx, (N, inplanes, H, W), jnp.float32)
    params = make_params(kp, inplanes, planes)

    out = atrous_module_forward(x_nchw, params, rate=rate)
    out = jax.block_until_ready(out)

    ref = reference_nchw(x_nchw, params, rate=rate)
    assert out.shape == (N, planes, H, W)
    max_err = float(jnp.max(jnp.abs(out - ref)))
    # bf16 MXU operands (f32 accumulation) -> small numeric drift vs f32 reference.
    assert jnp.allclose(out, ref, atol=5e-2, rtol=5e-2), f"mismatch vs reference (max abs err {max_err})"

    print("KERNEL_OK")
</pallas_src>

<mosaic_0001>
module attributes {stable_mosaic.version = 11 : i64} {
  func.func @_atrous_kernel(%arg0: i32, %arg1: i32, %arg2: memref<1x20x20x128xbf16, #tpu.memory_space<vmem>>, %arg3: memref<1152x128xbf16, #tpu.memory_space<vmem>>, %arg4: memref<1x128xf32, #tpu.memory_space<vmem>>, %arg5: memref<1x8x16x128xf32, #tpu.memory_space<vmem>>) attributes {dimension_semantics = [#tpu.dimension_semantics<parallel>, #tpu.dimension_semantics<arbitrary>], iteration_bounds = array<i64: 2, 2>, scalar_prefetch = 0 : i64, scratch_operands = 0 : i64, tpu.core_type = #tpu.core_type<tc>, window_params = [{transform_indices = @transform_0, window_bounds = array<i64: 1, 20, 20, 128>}, {pipeline_mode = #tpu.pipeline_mode<synchronous>, transform_indices = @transform_1, window_bounds = array<i64: 1152, 128>}, {pipeline_mode = #tpu.pipeline_mode<synchronous>, transform_indices = @transform_2, window_bounds = array<i64: 1, 128>}, {transform_indices = @transform_3, window_bounds = array<i64: 1, 8, 16, 128>}]} {
    %c8_i32 = arith.constant 8 : i32
    %0 = arith.muli %arg1, %c8_i32 : i32
    %1 = tpu.assume_multiple %0, 8 : i32
    %c0 = arith.constant 0 : index
    %2 = arith.index_cast %1 : i32 to index
    %c0_0 = arith.constant 0 : index
    %c0_1 = arith.constant 0 : index
    %3 = vector.load %arg2[%c0, %2, %c0_0, %c0_1] : memref<1x20x20x128xbf16, #tpu.memory_space<vmem>>, vector<1x12x20x128xbf16>
    %4 = vector.shape_cast %3 : vector<1x12x20x128xbf16> to vector<12x20x128xbf16>
    %5 = vector.extract_strided_slice %4 {offsets = [0, 0, 0], sizes = [8, 16, 128], strides = [1, 1, 1]} : vector<12x20x128xbf16> to vector<8x16x128xbf16>
    %6 = vector.shape_cast %5 : vector<8x16x128xbf16> to vector<128x128xbf16>
    %7 = vector.extract_strided_slice %4 {offsets = [0, 2, 0], sizes = [8, 16, 128], strides = [1, 1, 1]} : vector<12x20x128xbf16> to vector<8x16x128xbf16>
    %8 = vector.shape_cast %7 : vector<8x16x128xbf16> to vector<128x128xbf16>
    %9 = vector.extract_strided_slice %4 {offsets = [0, 4, 0], sizes = [8, 16, 128], strides = [1, 1, 1]} : vector<12x20x128xbf16> to vector<8x16x128xbf16>
    %10 = vector.shape_cast %9 : vector<8x16x128xbf16> to vector<128x128xbf16>
    %11 = vector.extract_strided_slice %4 {offsets = [2, 0, 0], sizes = [8, 16, 128], strides = [1, 1, 1]} : vector<12x20x128xbf16> to vector<8x16x128xbf16>
    %12 = vector.shape_cast %11 : vector<8x16x128xbf16> to vector<128x128xbf16>
    %13 = vector.extract_strided_slice %4 {offsets = [2, 2, 0], sizes = [8, 16, 128], strides = [1, 1, 1]} : vector<12x20x128xbf16> to vector<8x16x128xbf16>
    %14 = vector.shape_cast %13 : vector<8x16x128xbf16> to vector<128x128xbf16>
    %15 = vector.extract_strided_slice %4 {offsets = [2, 4, 0], sizes = [8, 16, 128], strides = [1, 1, 1]} : vector<12x20x128xbf16> to vector<8x16x128xbf16>
    %16 = vector.shape_cast %15 : vector<8x16x128xbf16> to vector<128x128xbf16>
    %17 = vector.extract_strided_slice %4 {offsets = [4, 0, 0], sizes = [8, 16, 128], strides = [1, 1, 1]} : vector<12x20x128xbf16> to vector<8x16x128xbf16>
    %18 = vector.shape_cast %17 : vector<8x16x128xbf16> to vector<128x128xbf16>
    %19 = vector.extract_strided_slice %4 {offsets = [4, 2, 0], sizes = [8, 16, 128], strides = [1, 1, 1]} : vector<12x20x128xbf16> to vector<8x16x128xbf16>
    %20 = vector.shape_cast %19 : vector<8x16x128xbf16> to vector<128x128xbf16>
    %21 = vector.extract_strided_slice %4 {offsets = [4, 4, 0], sizes = [8, 16, 128], strides = [1, 1, 1]} : vector<12x20x128xbf16> to vector<8x16x128xbf16>
    %22 = vector.shape_cast %21 : vector<8x16x128xbf16> to vector<128x128xbf16>
    %23 = tpu.concatenate %6, %8, %10, %12, %14, %16, %18, %20, %22 in 1 : vector<128x128xbf16>, vector<128x128xbf16>, vector<128x128xbf16>, vector<128x128xbf16>, vector<128x128xbf16>, vector<128x128xbf16>, vector<128x128xbf16>, vector<128x128xbf16>, vector<128x128xbf16> -> vector<128x1152xbf16>
    %c0_2 = arith.constant 0 : index
    %c0_3 = arith.constant 0 : index
    %24 = vector.load %arg3[%c0_2, %c0_3] : memref<1152x128xbf16, #tpu.memory_space<vmem>>, vector<1152x128xbf16>
    %cst = arith.constant dense<0.000000e+00> : vector<128x128xf32>
    %25 = tpu.matmul %23, %24, %cst {dimension_numbers = #tpu.dot_dimension_numbers<[1], [0], [0], [1], [0, 0, 1, 1], [], []>} : vector<128x1152xbf16>, vector<1152x128xbf16>, vector<128x128xf32> -> vector<128x128xf32>
    %c0_4 = arith.constant 0 : index
    %c0_5 = arith.constant 0 : index
    %26 = vector.load %arg4[%c0_4, %c0_5] : memref<1x128xf32, #tpu.memory_space<vmem>>, vector<1x128xf32>
    %27 = vector.broadcast %26 : vector<1x128xf32> to vector<128x128xf32>
    %28 = arith.addf %25, %27 : vector<128x128xf32>
    %29 = vector.shape_cast %28 : vector<128x128xf32> to vector<8x16x128xf32>
    %c0_6 = arith.constant 0 : index
    %c0_7 = arith.constant 0 : index
    %c0_8 = arith.constant 0 : index
    %c0_9 = arith.constant 0 : index
    %30 = vector.load %arg5[%c0_6, %c0_7, %c0_8, %c0_9] : memref<1x8x16x128xf32, #tpu.memory_space<vmem>>, vector<1x8x16x128xf32>
    %31 = vector.shape_cast %30 : vector<1x8x16x128xf32> to vector<8x16x128xf32>
    %32 = vector.shape_cast %29 : vector<8x16x128xf32> to vector<1x8x16x128xf32>
    tpu.vector_store %arg5[%c0_6, %c0_7, %c0_8, %c0_9], %32 {strides = array<i32>} : memref<1x8x16x128xf32, #tpu.memory_space<vmem>>, vector<1x8x16x128xf32>,
    return
  }
  func.func @transform_0(%arg0: i32, %arg1: i32) -> (i32, i32, i32, i32) {
    %c0_i32 = arith.constant 0 : i32
    %c0_i32_0 = arith.constant 0 : i32
    %c0_i32_1 = arith.constant 0 : i32
    %c0_i32_2 = arith.constant 0 : i32
    return %arg0, %c0_i32, %c0_i32_0, %c0_i32_1 : i32, i32, i32, i32
  }
  func.func @transform_1(%arg0: i32, %arg1: i32) -> (i32, i32) {
    %c0_i32 = arith.constant 0 : i32
    %c0_i32_0 = arith.constant 0 : i32
    %c0_i32_1 = arith.constant 0 : i32
    return %c0_i32, %c0_i32_0 : i32, i32
  }
  func.func @transform_2(%arg0: i32, %arg1: i32) -> (i32, i32) {
    %c0_i32 = arith.constant 0 : i32
    %c0_i32_0 = arith.constant 0 : i32
    %c0_i32_1 = arith.constant 0 : i32
    return %c0_i32, %c0_i32_0 : i32, i32
  }
  func.func @transform_3(%arg0: i32, %arg1: i32) -> (i32, i32, i32, i32) {
    %c0_i32 = arith.constant 0 : i32
    %c0_i32_0 = arith.constant 0 : i32
    %c0_i32_1 = arith.constant 0 : i32
    return %arg0, %arg1, %c0_i32, %c0_i32_0 : i32, i32, i32, i32
  }
}

</mosaic_0001>

<llo_original>
// kernel: tpu_custom_call.1
$region0: #{tpu_custom_call.1}
  #allocation0 [shape = 'u32[]', space=smem, size = 0x4, offset = 0x4, fixed_abs, tag = 'smem constant byte address 0x4 - core index']
  #allocation1 [shape = 'u32[72,128]{1,0:T(1,128)}', space=vmem, size = 0x9000, scoped, tag = 'internal scratch']
  %s0 = inlined_call_operand.vmem [shape: bf16[2,20,20,128], index: 0, kind: input, shape index: {}]
  %s1 = inlined_call_operand.vmem [shape: bf16[1152,128], index: 1, kind: input, shape index: {}]
  %s2 = inlined_call_operand.vmem [shape: f32[1,128], index: 2, kind: input, shape index: {}]
  %s3 = inlined_call_operand.hbm [shape: f32[2,16,16,128], index: 3, kind: output, shape index: {}]
  %s4 = sld [smem:[#allocation0]]
  $region45: #{tpu_custom_call.1} parent=0
    _
  %s6 = ssub.s32 1, %s4
  %s7 = scalar_select 0, %s6, %s4
  $region1: #{tpu_custom_call.1} parent=0
    #allocation2 [shape = 'u8[131072]{0}', space=vmem, size = 0x20000, scoped, tag = 'output window, operand 0']
    #allocation3 [shape = 's32[2]{0}', space=sflag, size = 0x8, scoped, tag = 'scoped memory for tpu_custom_call.1']
    %8 = vsyncpa [#allocation3], 0
    %s9 = scalar_lea.sflag [#allocation3], 1
    %10 = vsyncpa %s9, 0
    loop: start=0, step=1, limit=6
    $region2: #{tpu_custom_call.1} parent=1 // loop_pre_header
      _
    $region3: #{tpu_custom_call.1} parent=1 // loop_header
      %s12 = sphi 0, %s16
      %p13 = scmp.ge.s32.totalorder %s12, 6
      %s19 = sphi 0, %s31
      %s20 = sphi 0, %s27
      %s21 = sphi 0, %s19
      %s22 = sphi 0, %s20
      %s23 = sphi 0, %s21
      %s24 = sphi 0, %s22
      %s34 = sphi 0, %s36
      %s37 = sphi 0, %s34
      %s38 = sphi 0, %s37
      %s54 = sphi 0, %s38
      %s58 = sphi 0, %s58
      %s60 = sphi 0, %s58
      %s61 = sphi 0, %s60
      %s75 = sphi 0, %s61
      %s79 = sphi 0, %s79
      %s81 = sphi 0, %s79
      %s82 = sphi 0, %s81
      %s96 = sphi 0, %s82
      %s104 = sphi 0, %s106
      %s107 = sphi 0, %s104
      %s108 = sphi 0, %s107
      %s124 = sphi 0, %s108
    $region4: #{tpu_custom_call.1} parent=1 // loop_header_branch
      %15 = sbr.rel (%p13) target = $region8
    $region5: #{tpu_custom_call.1} parent=1 // loop_body
      %s17 = ssub.s32 %s12, 1
      %s18 = ssub.s32 %s12, 2
      %s25 = sadd.s32 1, %s20
      %p26 = scmp.ge.s32.totalorder %s25, 2
      %s27 = scalar_select %p26, 0, %s25
      %s28 = sadd.s32 1, %s19
      %s29 = scalar_select %p26, %s28, %s19
      %p30 = scmp.ge.s32.totalorder %s29, 2
      %s31 = scalar_select %p30, 0, %s29
      %s32 = ssub.s32 %s19, %s31
      %p33 = scmp.eq.s32.totalorder %s32, 0
      %s35 = sadd.s32 %s34, 1
      %s36 = scalar_select %p33, %s34, %s35
      %p39 = pneg %p33
      %p40 = scmp.eq.s32.totalorder %s12, 3
      %p41 = por %p39, %p40
      %p42 = scmp.ne.s32.totalorder %s34, %s37
      %p43 = scmp.eq.s32.totalorder %s12, 0
      %p44 = por %p42, %p43
      %p45 = scmp.ne.s32.totalorder %s34, %s37
      %p46 = scmp.eq.s32.totalorder %s17, 3
      %p47 = por %p45, %p46
      %p48 = scmp.ne.s32.totalorder %s37, %s38
      %p49 = scmp.eq.s32.totalorder %s17, 0
      %p50 = por %p48, %p49
      %p51 = scmp.ne.s32.totalorder %s37, %s38
      %p52 = scmp.eq.s32.totalorder %s18, 3
      %p53 = por %p51, %p52
      %p55 = scmp.ne.s32.totalorder %s38, %s54
      %p56 = scmp.eq.s32.totalorder %s18, 0
      %p57 = por %p55, %p56
      %s59 = sadd.s32 %s58, 1
      %p62 = scmp.eq.s32.totalorder %s12, 3
      %p63 = scmp.ne.s32.totalorder %s58, %s60
      %p64 = scmp.eq.s32.totalorder %s12, 0
      %p65 = por %p63, %p64
      %p66 = scmp.ne.s32.totalorder %s58, %s60
      %p67 = scmp.eq.s32.totalorder %s17, 3
      %p68 = por %p66, %p67
      %p69 = scmp.ne.s32.totalorder %s60, %s61
      %p70 = scmp.eq.s32.totalorder %s17, 0
      %p71 = por %p69, %p70
      %p72 = scmp.ne.s32.totalorder %s60, %s61
      %p73 = scmp.eq.s32.totalorder %s18, 3
      %p74 = por %p72, %p73
      %p76 = scmp.ne.s32.totalorder %s61, %s75
      %p77 = scmp.eq.s32.totalorder %s18, 0
      %p78 = por %p76, %p77
      %s80 = sadd.s32 %s79, 1
      %p83 = scmp.eq.s32.totalorder %s12, 3
      %p84 = scmp.ne.s32.totalorder %s79, %s81
      %p85 = scmp.eq.s32.totalorder %s12, 0
      %p86 = por %p84, %p85
      %p87 = scmp.ne.s32.totalorder %s79, %s81
      %p88 = scmp.eq.s32.totalorder %s17, 3
      %p89 = por %p87, %p88
      %p90 = scmp.ne.s32.totalorder %s81, %s82
      %p91 = scmp.eq.s32.totalorder %s17, 0
      %p92 = por %p90, %p91
      %p93 = scmp.ne.s32.totalorder %s81, %s82
      %p94 = scmp.eq.s32.totalorder %s18, 3
      %p95 = por %p93, %p94
      %p97 = scmp.ne.s32.totalorder %s82, %s96
      %p98 = scmp.eq.s32.totalorder %s18, 0
      %p99 = por %p97, %p98
      %s100 = ssub.s32 %s19, %s31
      %s101 = ssub.s32 %s20, %s27
      %s102 = sor.u32 %s100, %s101
      %p103 = scmp.eq.s32.totalorder %s102, 0
      %s105 = sadd.s32 %s104, 1
      %s106 = scalar_select %p103, %s104, %s105
      %p109 = pneg %p103
      %p110 = scmp.eq.s32.totalorder %s12, 3
      %p111 = por %p109, %p110
      %p112 = scmp.ne.s32.totalorder %s104, %s107
      %p113 = scmp.eq.s32.totalorder %s12, 0
      %p114 = por %p112, %p113
      %p115 = scmp.ne.s32.totalorder %s104, %s107
      %p116 = scmp.eq.s32.totalorder %s17, 3
      %p117 = por %p115, %p116
      %p118 = scmp.ne.s32.totalorder %s107, %s108
      %p119 = scmp.eq.s32.totalorder %s17, 0
      %p120 = por %p118, %p119
      %p121 = scmp.ne.s32.totalorder %s107, %s108
      %p122 = scmp.eq.s32.totalorder %s18, 3
      %p123 = por %p121, %p122
      %p125 = scmp.ne.s32.totalorder %s108, %s124
      %p126 = scmp.eq.s32.totalorder %s18, 0
      %p127 = por %p125, %p126
      %p128 = scmp.le.s32.totalorder 1, %s12
      %p129 = scmp.lt.s32.totalorder %s12, 5
      %p130 = pnand %p128, %p129
      %p131 = pneg %p130
      // Predicated region
      $region9: #{tpu_custom_call.1} parent=5 // pred_check
        _
      $region10: #{tpu_custom_call.1} parent=5 // pred_check_branch
        %133 = sbr.rel (%p130) target = $region12
      $region11: #{tpu_custom_call.1} parent=5 // pred_region
        %s134 = ssub.s32 %s12, 1
        // Predicated region
        $region13: #{tpu_custom_call.1} parent=11 // pred_check
          %p135 = pneg %p71
        $region14: #{tpu_custom_call.1} parent=11 // pred_check_branch
          %137 = sbr.rel (%p135) target = $region16
        $region15: #{tpu_custom_call.1} parent=11 // pred_region
          _
        $region16: #{tpu_custom_call.1} parent=11 // pred_fallthru
          _
        // Predicated region
        $region17: #{tpu_custom_call.1} parent=11 // pred_check
          %p138 = pneg %p92
        $region18: #{tpu_custom_call.1} parent=11 // pred_check_branch
          %140 = sbr.rel (%p138) target = $region20
        $region19: #{tpu_custom_call.1} parent=11 // pred_region
          _
        $region20: #{tpu_custom_call.1} parent=11 // pred_fallthru
          _
      $region12: #{tpu_custom_call.1} parent=5 // pred_fallthru
        _
      %p141 = scmp.lt.s32.totalorder %s12, 4
      // Predicated region
      $region21: #{tpu_custom_call.1} parent=5 // pred_check
        %p142 = pneg %p141
      $region22: #{tpu_custom_call.1} parent=5 // pred_check_branch
        %144 = sbr.rel (%p142) target = $region24
      $region23: #{tpu_custom_call.1} parent=5 // pred_region
        // Predicated region
        $region25: #{tpu_custom_call.1} parent=23 // pred_check
          %p145 = pneg %p44
        $region26: #{tpu_custom_call.1} parent=23 // pred_check_branch
          %147 = sbr.rel (%p145) target = $region28
        $region27: #{tpu_custom_call.1} parent=23 // pred_region
          %p148 = scmp.lt.s32.totalorder %s19, 1
          %s149 = scalar_select %p148, %s19, 1
          %s150 = smul.addr %s149, 60
          %s151 = smul.addr %s150, 4
          %s152 = scalar_lea.vmem %s0, %s151
        $region28: #{tpu_custom_call.1} parent=23 // pred_fallthru
          _
      $region24: #{tpu_custom_call.1} parent=5 // pred_fallthru
        _
      %p153 = scmp.le.s32.totalorder 1, %s12
      %p154 = scmp.lt.s32.totalorder %s12, 5
      %p155 = pnand %p153, %p154
      %p156 = pneg %p155
      // Predicated region
      $region29: #{tpu_custom_call.1} parent=5 // pred_check
        _
      $region30: #{tpu_custom_call.1} parent=5 // pred_check_branch
        %158 = sbr.rel (%p155) target = $region32
      $region31: #{tpu_custom_call.1} parent=5 // pred_region
        %s159 = ssub.s32 %s12, 1
        %p160 = scmp.lt.s32.totalorder %s21, 1
        %s161 = scalar_select %p160, %s21, 1
        %s162 = smul.addr %s161, 60
        %s163 = smul.addr %s162, 4
        %s164 = scalar_lea.vmem %s0, %s163
        %p165 = pneg %p50
        %p166 = pneg %p47
        %p167 = pneg %p71
        %p168 = pneg %p68
        %p169 = pneg %p92
        %p170 = pneg %p89
        %p171 = pneg %p120
        %p172 = pneg %p117
        %s173 = sand.u32 %s107, 1
        %s174 = scalar_lea.sflag [#allocation3], %s173
        %s175 = sand.u32 %s107, 1
        %s176 = smul.addr %s175, 128
        %s177 = scalar_lea.vmem [#allocation2], %s176
        %p178 = scmp.lt.s32.totalorder %s21, 1
        %s179 = scalar_select %p178, %s21, 1
        %s180 = smul.addr %s179, 60
        %s181 = smul.addr %s180, 4
        %s182 = scalar_lea.vmem %s0, %s181
        %s183 = smul.u32 8, %s22
        %s184 = smul.u32 %s22, 8
        %s185 = smul.u32 %s184, 3
        %s186 = smul.addr %s185, 4
        %s187 = scalar_lea.vmem %s182, %s186
        %v188 = vld [vmem:[%s187] sm:$0xf]
        %v189 = vld [vmem:[%s187 + $0x4] sm:$0xf]
        %v190 = vld [vmem:[%s187 + $0x8] sm:$0x3]
        %v191 = vld [vmem:[%s187 + $0xc] sm:$0xf]
        %v192 = vld [vmem:[%s187 + $0x10] sm:$0xf]
        %v193 = vld [vmem:[%s187 + $0x14] sm:$0x3]
        %v194 = vld [vmem:[%s187 + $0x18] sm:$0xf]
        %v195 = vld [vmem:[%s187 + $0x1c] sm:$0xf]
        %v196 = vld [vmem:[%s187 + $0x20] sm:$0x3]
        %v197 = vld [vmem:[%s187 + $0x24] sm:$0xf]
        %v198 = vld [vmem:[%s187 + $0x28] sm:$0xf]
        %v199 = vld [vmem:[%s187 + $0x2c] sm:$0x3]
        %v200 = vld [vmem:[%s187 + $0x30] sm:$0xf]
        %v201 = vld [vmem:[%s187 + $0x34] sm:$0xf]
        %v202 = vld [vmem:[%s187 + $0x38] sm:$0x3]
        %v203 = vld [vmem:[%s187 + $0x3c] sm:$0xf]
        %v204 = vld [vmem:[%s187 + $0x40] sm:$0xf]
        %v205 = vld [vmem:[%s187 + $0x44] sm:$0x3]
        %v206 = vld [vmem:[%s187 + $0x48] sm:$0xf]
        %v207 = vld [vmem:[%s187 + $0x4c] sm:$0xf]
        %v208 = vld [vmem:[%s187 + $0x50] sm:$0x3]
        %v209 = vld [vmem:[%s187 + $0x54] sm:$0xf]
        %v210 = vld [vmem:[%s187 + $0x58] sm:$0xf]
        %v211 = vld [vmem:[%s187 + $0x5c] sm:$0x3]
        %v212 = vld [vmem:[%s187 + $0x60] sm:$0xf]
        %v213 = vld [vmem:[%s187 + $0x64] sm:$0xf]
        %v214 = vld [vmem:[%s187 + $0x68] sm:$0x3]
        %v215 = vld [vmem:[%s187 + $0x6c] sm:$0xf]
        %v216 = vld [vmem:[%s187 + $0x70] sm:$0xf]
        %v217 = vld [vmem:[%s187 + $0x74] sm:$0x3]
        %v218 = vld [vmem:[%s187 + $0x78] sm:$0xf]
        %v219 = vld [vmem:[%s187 + $0x7c] sm:$0xf]
        %v220 = vld [vmem:[%s187 + $0x80] sm:$0x3]
        %v221 = vld [vmem:[%s187 + $0x84] sm:$0xf]
        %v222 = vld [vmem:[%s187 + $0x88] sm:$0xf]
        %v223 = vld [vmem:[%s187 + $0x8c] sm:$0x3]
        %vm248 = vcmask 1042432
        %vm249 = vcmask 1046532
        %vm250 = vmor %vm248, %vm249
        %v251 = vrot.slane %v188, 5
        %v252 = vrot.slane %v251, 4
        %v253 = vrot.slane %v189, 5
        %v254 = vsel %vm250, %v252, %v253
        %v255 = vrot.slane %v253, 4
        %v256 = vrot.slane %v190, 5
        %v257 = vsel %vm250, %v255, %v256
        %v258 = vrot.slane %v191, 5
        %v259 = vrot.slane %v258, 4
        %v260 = vrot.slane %v192, 5
        %v261 = vsel %vm250, %v259, %v260
        %v262 = vrot.slane %v260, 4
        %v263 = vrot.slane %v193, 5
        %v264 = vsel %vm250, %v262, %v263
        %v265 = vrot.slane %v194, 5
        %v266 = vrot.slane %v265, 4
        %v267 = vrot.slane %v195, 5
        %v268 = vsel %vm250, %v266, %v267
        %v269 = vrot.slane %v267, 4
        %v270 = vrot.slane %v196, 5
        %v271 = vsel %vm250, %v269, %v270
        %v272 = vrot.slane %v197, 5
        %v273 = vrot.slane %v272, 4
        %v274 = vrot.slane %v198, 5
        %v275 = vsel %vm250, %v273, %v274
        %v276 = vrot.slane %v274, 4
        %v277 = vrot.slane %v199, 5
        %v278 = vsel %vm250, %v276, %v277
        %v279 = vrot.slane %v200, 5
        %v280 = vrot.slane %v279, 4
        %v281 = vrot.slane %v201, 5
        %v282 = vsel %vm250, %v280, %v281
        %v283 = vrot.slane %v281, 4
        %v284 = vrot.slane %v202, 5
        %v285 = vsel %vm250, %v283, %v284
        %v286 = vrot.slane %v203, 5
        %v287 = vrot.slane %v286, 4
        %v288 = vrot.slane %v204, 5
        %v289 = vsel %vm250, %v287, %v288
        %v290 = vrot.slane %v288, 4
        %v291 = vrot.slane %v205, 5
        %v292 = vsel %vm250, %v290, %v291
        %v293 = vrot.slane %v206, 5
        %v294 = vrot.slane %v293, 4
        %v295 = vrot.slane %v207, 5
        %v296 = vsel %vm250, %v294, %v295
        %v297 = vrot.slane %v295, 4
        %v298 = vrot.slane %v208, 5
        %v299 = vsel %vm250, %v297, %v298
        %v300 = vrot.slane %v209, 5
        %v301 = vrot.slane %v300, 4
        %v302 = vrot.slane %v210, 5
        %v303 = vsel %vm250, %v301, %v302
        %v304 = vrot.slane %v302, 4
        %v305 = vrot.slane %v211, 5
        %v306 = vsel %vm250, %v304, %v305
        %vm307 = vcmask 1041408
        %vm308 = vcmask 1045508
        %vm309 = vmor %vm307, %vm308
        %v310 = vrot.slane %v188, 6
        %v311 = vrot.slane %v310, 4
        %v312 = vrot.slane %v189, 6
        %v313 = vsel %vm309, %v311, %v312
        %v314 = vrot.slane %v312, 4
        %v315 = vrot.slane %v190, 6
        %v316 = vsel %vm309, %v314, %v315
        %v317 = vrot.slane %v191, 6
        %v318 = vrot.slane %v317, 4
        %v319 = vrot.slane %v192, 6
        %v320 = vsel %vm309, %v318, %v319
        %v321 = vrot.slane %v319, 4
        %v322 = vrot.slane %v193, 6
        %v323 = vsel %vm309, %v321, %v322
        %v324 = vrot.slane %v194, 6
        %v325 = vrot.slane %v324, 4
        %v326 = vrot.slane %v195, 6
        %v327 = vsel %vm309, %v325, %v326
        %v328 = vrot.slane %v326, 4
        %v329 = vrot.slane %v196, 6
        %v330 = vsel %vm309, %v328, %v329
        %v331 = vrot.slane %v197, 6
        %v332 = vrot.slane %v331, 4
        %v333 = vrot.slane %v198, 6
        %v334 = vsel %vm309, %v332, %v333
        %v335 = vrot.slane %v333, 4
        %v336 = vrot.slane %v199, 6
        %v337 = vsel %vm309, %v335, %v336
        %v338 = vrot.slane %v200, 6
        %v339 = vrot.slane %v338, 4
        %v340 = vrot.slane %v201, 6
        %v341 = vsel %vm309, %v339, %v340
        %v342 = vrot.slane %v340, 4
        %v343 = vrot.slane %v202, 6
        %v344 = vsel %vm309, %v342, %v343
        %v345 = vrot.slane %v203, 6
        %v346 = vrot.slane %v345, 4
        %v347 = vrot.slane %v204, 6
        %v348 = vsel %vm309, %v346, %v347
        %v349 = vrot.slane %v347, 4
        %v350 = vrot.slane %v205, 6
        %v351 = vsel %vm309, %v349, %v350
        %v352 = vrot.slane %v206, 6
        %v353 = vrot.slane %v352, 4
        %v354 = vrot.slane %v207, 6
        %v355 = vsel %vm309, %v353, %v354
        %v356 = vrot.slane %v354, 4
        %v357 = vrot.slane %v208, 6
        %v358 = vsel %vm309, %v356, %v357
        %v359 = vrot.slane %v209, 6
        %v360 = vrot.slane %v359, 4
        %v361 = vrot.slane %v210, 6
        %v362 = vsel %vm309, %v360, %v361
        %v363 = vrot.slane %v361, 4
        %v364 = vrot.slane %v211, 6
        %v365 = vsel %vm309, %v363, %v364
        %v372 = vrot.slane %v212, 5
        %v373 = vrot.slane %v372, 4
        %v374 = vrot.slane %v213, 5
        %v375 = vsel %vm250, %v373, %v374
        %v376 = vrot.slane %v374, 4
        %v377 = vrot.slane %v214, 5
        %v378 = vsel %vm250, %v376, %v377
        %v379 = vrot.slane %v215, 5
        %v380 = vrot.slane %v379, 4
        %v381 = vrot.slane %v216, 5
        %v382 = vsel %vm250, %v380, %v381
        %v383 = vrot.slane %v381, 4
        %v384 = vrot.slane %v217, 5
        %v385 = vsel %vm250, %v383, %v384
        %v386 = vrot.slane %v212, 6
        %v387 = vrot.slane %v386, 4
        %v388 = vrot.slane %v213, 6
        %v389 = vsel %vm309, %v387, %v388
        %v390 = vrot.slane %v388, 4
        %v391 = vrot.slane %v214, 6
        %v392 = vsel %vm309, %v390, %v391
        %v393 = vrot.slane %v215, 6
        %v394 = vrot.slane %v393, 4
        %v395 = vrot.slane %v216, 6
        %v396 = vsel %vm309, %v394, %v395
        %v397 = vrot.slane %v395, 4
        %v398 = vrot.slane %v217, 6
        %v399 = vsel %vm309, %v397, %v398
        %v406 = vrot.slane %v218, 5
        %v407 = vrot.slane %v406, 4
        %v408 = vrot.slane %v219, 5
        %v409 = vsel %vm250, %v407, %v408
        %v410 = vrot.slane %v408, 4
        %v411 = vrot.slane %v220, 5
        %v412 = vsel %vm250, %v410, %v411
        %v413 = vrot.slane %v221, 5
        %v414 = vrot.slane %v413, 4
        %v415 = vrot.slane %v222, 5
        %v416 = vsel %vm250, %v414, %v415
        %v417 = vrot.slane %v415, 4
        %v418 = vrot.slane %v223, 5
        %v419 = vsel %vm250, %v417, %v418
        %v420 = vrot.slane %v218, 6
        %v421 = vrot.slane %v420, 4
        %v422 = vrot.slane %v219, 6
        %v423 = vsel %vm309, %v421, %v422
        %v424 = vrot.slane %v422, 4
        %v425 = vrot.slane %v220, 6
        %v426 = vsel %vm309, %v424, %v425
        %v427 = vrot.slane %v221, 6
        %v428 = vrot.slane %v427, 4
        %v429 = vrot.slane %v222, 6
        %v430 = vsel %vm309, %v428, %v429
        %v431 = vrot.slane %v429, 4
        %v432 = vrot.slane %v223, 6
        %v433 = vsel %vm309, %v431, %v432
        %v434 = vunpack.c.l.b16 %v188
        %v435 = vunpack.c.l.b16 %v189
        %v436 = vunpack.c.l.b16 %v191
        %v437 = vunpack.c.l.b16 %v192
        %v438 = vunpack.c.l.b16 %v194
        %v439 = vunpack.c.l.b16 %v195
        %v440 = vunpack.c.l.b16 %v197
        %v441 = vunpack.c.l.b16 %v198
        %v442 = vunpack.c.l.b16 %v200
        %v443 = vunpack.c.l.b16 %v201
        %v444 = vunpack.c.l.b16 %v203
        %v445 = vunpack.c.l.b16 %v204
        %v446 = vunpack.c.l.b16 %v206
        %v447 = vunpack.c.l.b16 %v207
        %v448 = vunpack.c.l.b16 %v209
        %v449 = vunpack.c.l.b16 %v210
        %v450 = vpack.c.b16 %v435, %v434
        %v451 = vpack.c.b16 %v437, %v436
        %v452 = vpack.c.b16 %v439, %v438
        %v453 = vpack.c.b16 %v441, %v440
        %v454 = vpack.c.b16 %v443, %v442
        %v455 = vpack.c.b16 %v445, %v444
        %v456 = vpack.c.b16 %v447, %v446
        %v457 = vpack.c.b16 %v449, %v448
        %v466 = vunpack.c.l.b16 %v254
        %v467 = vunpack.c.l.b16 %v257
        %v468 = vunpack.c.l.b16 %v261
        %v469 = vunpack.c.l.b16 %v264
        %v470 = vunpack.c.l.b16 %v268
        %v471 = vunpack.c.l.b16 %v271
        %v472 = vunpack.c.l.b16 %v275
        %v473 = vunpack.c.l.b16 %v278
        %v474 = vunpack.c.l.b16 %v282
        %v475 = vunpack.c.l.b16 %v285
        %v476 = vunpack.c.l.b16 %v289
        %v477 = vunpack.c.l.b16 %v292
        %v478 = vunpack.c.l.b16 %v296
        %v479 = vunpack.c.l.b16 %v299
        %v480 = vunpack.c.l.b16 %v303
        %v481 = vunpack.c.l.b16 %v306
        %v482 = vpack.c.b16 %v467, %v466
        %v483 = vpack.c.b16 %v469, %v468
        %v484 = vpack.c.b16 %v471, %v470
        %v485 = vpack.c.b16 %v473, %v472
        %v486 = vpack.c.b16 %v475, %v474
        %v487 = vpack.c.b16 %v477, %v476
        %v488 = vpack.c.b16 %v479, %v478
        %v489 = vpack.c.b16 %v481, %v480
        %v498 = vunpack.c.l.b16 %v313
        %v499 = vunpack.c.l.b16 %v316
        %v500 = vunpack.c.l.b16 %v320
        %v501 = vunpack.c.l.b16 %v323
        %v502 = vunpack.c.l.b16 %v327
        %v503 = vunpack.c.l.b16 %v330
        %v504 = vunpack.c.l.b16 %v334
        %v505 = vunpack.c.l.b16 %v337
        %v506 = vunpack.c.l.b16 %v341
        %v507 = vunpack.c.l.b16 %v344
        %v508 = vunpack.c.l.b16 %v348
        %v509 = vunpack.c.l.b16 %v351
        %v510 = vunpack.c.l.b16 %v355
        %v511 = vunpack.c.l.b16 %v358
        %v512 = vunpack.c.l.b16 %v362
        %v513 = vunpack.c.l.b16 %v365
        %v514 = vpack.c.b16 %v499, %v498
        %v515 = vpack.c.b16 %v501, %v500
        %v516 = vpack.c.b16 %v503, %v502
        %v517 = vpack.c.b16 %v505, %v504
        %v518 = vpack.c.b16 %v507, %v506
        %v519 = vpack.c.b16 %v509, %v508
        %v520 = vpack.c.b16 %v511, %v510
        %v521 = vpack.c.b16 %v513, %v512
        %v530 = vunpack.c.l.b16 %v212
        %v531 = vunpack.c.l.b16 %v213
        %v532 = vunpack.c.l.b16 %v215
        %v533 = vunpack.c.l.b16 %v216
        %v534 = vpack.c.b16 %v531, %v530
        %v535 = vpack.c.b16 %v533, %v532
        %v538 = vunpack.c.l.b16 %v375
        %v539 = vunpack.c.l.b16 %v378
        %v540 = vunpack.c.l.b16 %v382
        %v541 = vunpack.c.l.b16 %v385
        %v542 = vpack.c.b16 %v539, %v538
        %v543 = vpack.c.b16 %v541, %v540
        %v546 = vunpack.c.l.b16 %v389
        %v547 = vunpack.c.l.b16 %v392
        %v548 = vunpack.c.l.b16 %v396
        %v549 = vunpack.c.l.b16 %v399
        %v550 = vpack.c.b16 %v547, %v546
        %v551 = vpack.c.b16 %v549, %v548
        %v554 = vunpack.c.l.b16 %v218
        %v555 = vunpack.c.l.b16 %v219
        %v556 = vunpack.c.l.b16 %v221
        %v557 = vunpack.c.l.b16 %v222
        %v558 = vpack.c.b16 %v555, %v554
        %v559 = vpack.c.b16 %v557, %v556
        %v562 = vunpack.c.l.b16 %v409
        %v563 = vunpack.c.l.b16 %v412
        %v564 = vunpack.c.l.b16 %v416
        %v565 = vunpack.c.l.b16 %v419
        %v566 = vpack.c.b16 %v563, %v562
        %v567 = vpack.c.b16 %v565, %v564
        %v570 = vunpack.c.l.b16 %v423
        %v571 = vunpack.c.l.b16 %v426
        %v572 = vunpack.c.l.b16 %v430
        %v573 = vunpack.c.l.b16 %v433
        %v574 = vpack.c.b16 %v571, %v570
        %v575 = vpack.c.b16 %v573, %v572
        %v578 = vld [vmem:[%s1] sm:$0xf]
        %v579 = vld [vmem:[%s1 + $0x4] sm:$0xf]
        %v580 = vld [vmem:[%s1 + $0x8] sm:$0xf]
        %v581 = vld [vmem:[%s1 + $0xc] sm:$0xf]
        %v582 = vld [vmem:[%s1 + $0x10] sm:$0xf]
        %v583 = vld [vmem:[%s1 + $0x14] sm:$0xf]
        %v584 = vld [vmem:[%s1 + $0x18] sm:$0xf]
        %v585 = vld [vmem:[%s1 + $0x1c] sm:$0xf]
        %v586 = vld [vmem:[%s1 + $0x20] sm:$0xf]
        %v587 = vld [vmem:[%s1 + $0x24] sm:$0xf]
        %v588 = vld [vmem:[%s1 + $0x28] sm:$0xf]
        %v589 = vld [vmem:[%s1 + $0x2c] sm:$0xf]
        %v590 = vld [vmem:[%s1 + $0x30] sm:$0xf]
        %v591 = vld [vmem:[%s1 + $0x34] sm:$0xf]
        %v592 = vld [vmem:[%s1 + $0x38] sm:$0xf]
        %v593 = vld [vmem:[%s1 + $0x3c] sm:$0xf]
        %v594 = vld [vmem:[%s1 + $0x40] sm:$0xf]
        %v595 = vld [vmem:[%s1 + $0x44] sm:$0xf]
        %v596 = vld [vmem:[%s1 + $0x48] sm:$0xf]
        %v597 = vld [vmem:[%s1 + $0x4c] sm:$0xf]
        %v598 = vld [vmem:[%s1 + $0x50] sm:$0xf]
        %v599 = vld [vmem:[%s1 + $0x54] sm:$0xf]
        %v600 = vld [vmem:[%s1 + $0x58] sm:$0xf]
        %v601 = vld [vmem:[%s1 + $0x5c] sm:$0xf]
        %v602 = vld [vmem:[%s1 + $0x60] sm:$0xf]
        %v603 = vld [vmem:[%s1 + $0x64] sm:$0xf]
        %v604 = vld [vmem:[%s1 + $0x68] sm:$0xf]
        %v605 = vld [vmem:[%s1 + $0x6c] sm:$0xf]
        %v606 = vld [vmem:[%s1 + $0x70] sm:$0xf]
        %v607 = vld [vmem:[%s1 + $0x74] sm:$0xf]
        %v608 = vld [vmem:[%s1 + $0x78] sm:$0xf]
        %v609 = vld [vmem:[%s1 + $0x7c] sm:$0xf]
        %v610 = vld [vmem:[%s1 + $0x80] sm:$0xf]
        %v611 = vld [vmem:[%s1 + $0x84] sm:$0xf]
        %v612 = vld [vmem:[%s1 + $0x88] sm:$0xf]
        %v613 = vld [vmem:[%s1 + $0x8c] sm:$0xf]
        %v614 = vld [vmem:[%s1 + $0x90] sm:$0xf]
        %v615 = vld [vmem:[%s1 + $0x94] sm:$0xf]
        %v616 = vld [vmem:[%s1 + $0x98] sm:$0xf]
        %v617 = vld [vmem:[%s1 + $0x9c] sm:$0xf]
        %v618 = vld [vmem:[%s1 + $0xa0] sm:$0xf]
        %v619 = vld [vmem:[%s1 + $0xa4] sm:$0xf]
        %v620 = vld [vmem:[%s1 + $0xa8] sm:$0xf]
        %v621 = vld [vmem:[%s1 + $0xac] sm:$0xf]
        %v622 = vld [vmem:[%s1 + $0xb0] sm:$0xf]
        %v623 = vld [vmem:[%s1 + $0xb4] sm:$0xf]
        %v624 = vld [vmem:[%s1 + $0xb8] sm:$0xf]
        %v625 = vld [vmem:[%s1 + $0xbc] sm:$0xf]
        %v626 = vld [vmem:[%s1 + $0xc0] sm:$0xf]
        %v627 = vld [vmem:[%s1 + $0xc4] sm:$0xf]
        %v628 = vld [vmem:[%s1 + $0xc8] sm:$0xf]
        %v629 = vld [vmem:[%s1 + $0xcc] sm:$0xf]
        %v630 = vld [vmem:[%s1 + $0xd0] sm:$0xf]
        %v631 = vld [vmem:[%s1 + $0xd4] sm:$0xf]
        %v632 = vld [vmem:[%s1 + $0xd8] sm:$0xf]
        %v633 = vld [vmem:[%s1 + $0xdc] sm:$0xf]
        %v634 = vld [vmem:[%s1 + $0xe0] sm:$0xf]
        %v635 = vld [vmem:[%s1 + $0xe4] sm:$0xf]
        %v636 = vld [vmem:[%s1 + $0xe8] sm:$0xf]
        %v637 = vld [vmem:[%s1 + $0xec] sm:$0xf]
        %v638 = vld [vmem:[%s1 + $0xf0] sm:$0xf]
        %v639 = vld [vmem:[%s1 + $0xf4] sm:$0xf]
        %v640 = vld [vmem:[%s1 + $0xf8] sm:$0xf]
        %v641 = vld [vmem:[%s1 + $0xfc] sm:$0xf]
        %v642 = vld [vmem:[%s1 + $0x100] sm:$0xf]
        %v643 = vld [vmem:[%s1 + $0x104] sm:$0xf]
        %v644 = vld [vmem:[%s1 + $0x108] sm:$0xf]
        %v645 = vld [vmem:[%s1 + $0x10c] sm:$0xf]
        %v646 = vld [vmem:[%s1 + $0x110] sm:$0xf]
        %v647 = vld [vmem:[%s1 + $0x114] sm:$0xf]
        %v648 = vld [vmem:[%s1 + $0x118] sm:$0xf]
        %v649 = vld [vmem:[%s1 + $0x11c] sm:$0xf]
        %v650 = vld [vmem:[%s1 + $0x120] sm:$0xf]
        %v651 = vld [vmem:[%s1 + $0x124] sm:$0xf]
        %v652 = vld [vmem:[%s1 + $0x128] sm:$0xf]
        %v653 = vld [vmem:[%s1 + $0x12c] sm:$0xf]
        %v654 = vld [vmem:[%s1 + $0x130] sm:$0xf]
        %v655 = vld [vmem:[%s1 + $0x134] sm:$0xf]
        %v656 = vld [vmem:[%s1 + $0x138] sm:$0xf]
        %v657 = vld [vmem:[%s1 + $0x13c] sm:$0xf]
        %v658 = vld [vmem:[%s1 + $0x140] sm:$0xf]
        %v659 = vld [vmem:[%s1 + $0x144] sm:$0xf]
        %v660 = vld [vmem:[%s1 + $0x148] sm:$0xf]
        %v661 = vld [vmem:[%s1 + $0x14c] sm:$0xf]
        %v662 = vld [vmem:[%s1 + $0x150] sm:$0xf]
        %v663 = vld [vmem:[%s1 + $0x154] sm:$0xf]
        %v664 = vld [vmem:[%s1 + $0x158] sm:$0xf]
        %v665 = vld [vmem:[%s1 + $0x15c] sm:$0xf]
        %v666 = vld [vmem:[%s1 + $0x160] sm:$0xf]
        %v667 = vld [vmem:[%s1 + $0x164] sm:$0xf]
        %v668 = vld [vmem:[%s1 + $0x168] sm:$0xf]
        %v669 = vld [vmem:[%s1 + $0x16c] sm:$0xf]
        %v670 = vld [vmem:[%s1 + $0x170] sm:$0xf]
        %v671 = vld [vmem:[%s1 + $0x174] sm:$0xf]
        %v672 = vld [vmem:[%s1 + $0x178] sm:$0xf]
        %v673 = vld [vmem:[%s1 + $0x17c] sm:$0xf]
        %v674 = vld [vmem:[%s1 + $0x180] sm:$0xf]
        %v675 = vld [vmem:[%s1 + $0x184] sm:$0xf]
        %v676 = vld [vmem:[%s1 + $0x188] sm:$0xf]
        %v677 = vld [vmem:[%s1 + $0x18c] sm:$0xf]
        %v678 = vld [vmem:[%s1 + $0x190] sm:$0xf]
        %v679 = vld [vmem:[%s1 + $0x194] sm:$0xf]
        %v680 = vld [vmem:[%s1 + $0x198] sm:$0xf]
        %v681 = vld [vmem:[%s1 + $0x19c] sm:$0xf]
        %v682 = vld [vmem:[%s1 + $0x1a0] sm:$0xf]
        %v683 = vld [vmem:[%s1 + $0x1a4] sm:$0xf]
        %v684 = vld [vmem:[%s1 + $0x1a8] sm:$0xf]
        %v685 = vld [vmem:[%s1 + $0x1ac] sm:$0xf]
        %v686 = vld [vmem:[%s1 + $0x1b0] sm:$0xf]
        %v687 = vld [vmem:[%s1 + $0x1b4] sm:$0xf]
        %v688 = vld [vmem:[%s1 + $0x1b8] sm:$0xf]
        %v689 = vld [vmem:[%s1 + $0x1bc] sm:$0xf]
        %v690 = vld [vmem:[%s1 + $0x1c0] sm:$0xf]
        %v691 = vld [vmem:[%s1 + $0x1c4] sm:$0xf]
        %v692 = vld [vmem:[%s1 + $0x1c8] sm:$0xf]
        %v693 = vld [vmem:[%s1 + $0x1cc] sm:$0xf]
        %v694 = vld [vmem:[%s1 + $0x1d0] sm:$0xf]
        %v695 = vld [vmem:[%s1 + $0x1d4] sm:$0xf]
        %v696 = vld [vmem:[%s1 + $0x1d8] sm:$0xf]
        %v697 = vld [vmem:[%s1 + $0x1dc] sm:$0xf]
        %v698 = vld [vmem:[%s1 + $0x1e0] sm:$0xf]
        %v699 = vld [vmem:[%s1 + $0x1e4] sm:$0xf]
        %v700 = vld [vmem:[%s1 + $0x1e8] sm:$0xf]
        %v701 = vld [vmem:[%s1 + $0x1ec] sm:$0xf]
        %v702 = vld [vmem:[%s1 + $0x1f0] sm:$0xf]
        %v703 = vld [vmem:[%s1 + $0x1f4] sm:$0xf]
        %v704 = vld [vmem:[%s1 + $0x1f8] sm:$0xf]
        %v705 = vld [vmem:[%s1 + $0x1fc] sm:$0xf]
        %v706 = vld [vmem:[%s1 + $0x200] sm:$0xf]
        %v707 = vld [vmem:[%s1 + $0x204] sm:$0xf]
        %v708 = vld [vmem:[%s1 + $0x208] sm:$0xf]
        %v709 = vld [vmem:[%s1 + $0x20c] sm:$0xf]
        %v710 = vld [vmem:[%s1 + $0x210] sm:$0xf]
        %v711 = vld [vmem:[%s1 + $0x214] sm:$0xf]
        %v712 = vld [vmem:[%s1 + $0x218] sm:$0xf]
        %v713 = vld [vmem:[%s1 + $0x21c] sm:$0xf]
        %v714 = vld [vmem:[%s1 + $0x220] sm:$0xf]
        %v715 = vld [vmem:[%s1 + $0x224] sm:$0xf]
        %v716 = vld [vmem:[%s1 + $0x228] sm:$0xf]
        %v717 = vld [vmem:[%s1 + $0x22c] sm:$0xf]
        %v718 = vld [vmem:[%s1 + $0x230] sm:$0xf]
        %v719 = vld [vmem:[%s1 + $0x234] sm:$0xf]
        %v720 = vld [vmem:[%s1 + $0x238] sm:$0xf]
        %v721 = vld [vmem:[%s1 + $0x23c] sm:$0xf]
        %v722 = vld [vmem:[%s2] sm:$0x1]
        %v724 = vperm.slane %v722, 0
        %v870 = vunpack.c.l.b16 %v578
        %v871 = vunpack.c.l.b16 %v579
        %v872 = vunpack.c.l.b16 %v580
        %v873 = vunpack.c.l.b16 %v581
        %v874 = vunpack.c.l.b16 %v582
        %v875 = vunpack.c.l.b16 %v583
        %v876 = vunpack.c.l.b16 %v584
        %v877 = vunpack.c.l.b16 %v585
        %v878 = vunpack.c.l.b16 %v586
        %v879 = vunpack.c.l.b16 %v587
        %v880 = vunpack.c.l.b16 %v588
        %v881 = vunpack.c.l.b16 %v589
        %v882 = vunpack.c.l.b16 %v590
        %v883 = vunpack.c.l.b16 %v591
        %v884 = vunpack.c.l.b16 %v592
        %v885 = vunpack.c.l.b16 %v593
        %v886 = vunpack.c.l.b16 %v594
        %v887 = vunpack.c.l.b16 %v595
        %v888 = vunpack.c.l.b16 %v596
        %v889 = vunpack.c.l.b16 %v597
        %v890 = vunpack.c.l.b16 %v598
        %v891 = vunpack.c.l.b16 %v599
        %v892 = vunpack.c.l.b16 %v600
        %v893 = vunpack.c.l.b16 %v601
        %v894 = vunpack.c.l.b16 %v602
        %v895 = vunpack.c.l.b16 %v603
        %v896 = vunpack.c.l.b16 %v604
        %v897 = vunpack.c.l.b16 %v605
        %v898 = vunpack.c.l.b16 %v606
        %v899 = vunpack.c.l.b16 %v607
        %v900 = vunpack.c.l.b16 %v608
        %v901 = vunpack.c.l.b16 %v609
        %v902 = vunpack.c.l.b16 %v610
        %v903 = vunpack.c.l.b16 %v611
        %v904 = vunpack.c.l.b16 %v612
        %v905 = vunpack.c.l.b16 %v613
        %v906 = vunpack.c.l.b16 %v614
        %v907 = vunpack.c.l.b16 %v615
        %v908 = vunpack.c.l.b16 %v616
        %v909 = vunpack.c.l.b16 %v617
        %v910 = vunpack.c.l.b16 %v618
        %v911 = vunpack.c.l.b16 %v619
        %v912 = vunpack.c.l.b16 %v620
        %v913 = vunpack.c.l.b16 %v621
        %v914 = vunpack.c.l.b16 %v622
        %v915 = vunpack.c.l.b16 %v623
        %v916 = vunpack.c.l.b16 %v624
        %v917 = vunpack.c.l.b16 %v625
        %v918 = vunpack.c.l.b16 %v626
        %v919 = vunpack.c.l.b16 %v627
        %v920 = vunpack.c.l.b16 %v628
        %v921 = vunpack.c.l.b16 %v629
        %v922 = vunpack.c.l.b16 %v630
        %v923 = vunpack.c.l.b16 %v631
        %v924 = vunpack.c.l.b16 %v632
        %v925 = vunpack.c.l.b16 %v633
        %v926 = vunpack.c.l.b16 %v634
        %v927 = vunpack.c.l.b16 %v635
        %v928 = vunpack.c.l.b16 %v636
        %v929 = vunpack.c.l.b16 %v637
        %v930 = vunpack.c.l.b16 %v638
        %v931 = vunpack.c.l.b16 %v639
        %v932 = vunpack.c.l.b16 %v640
        %v933 = vunpack.c.l.b16 %v641
        %v934 = vunpack.c.l.b16 %v642
        %v935 = vunpack.c.l.b16 %v643
        %v936 = vunpack.c.l.b16 %v644
        %v937 = vunpack.c.l.b16 %v645
        %v938 = vunpack.c.l.b16 %v646
        %v939 = vunpack.c.l.b16 %v647
        %v940 = vunpack.c.l.b16 %v648
        %v941 = vunpack.c.l.b16 %v649
        %v942 = vunpack.c.l.b16 %v650
        %v943 = vunpack.c.l.b16 %v651
        %v944 = vunpack.c.l.b16 %v652
        %v945 = vunpack.c.l.b16 %v653
        %v946 = vunpack.c.l.b16 %v654
        %v947 = vunpack.c.l.b16 %v655
        %v948 = vunpack.c.l.b16 %v656
        %v949 = vunpack.c.l.b16 %v657
        %v950 = vunpack.c.l.b16 %v658
        %v951 = vunpack.c.l.b16 %v659
        %v952 = vunpack.c.l.b16 %v660
        %v953 = vunpack.c.l.b16 %v661
        %v954 = vunpack.c.l.b16 %v662
        %v955 = vunpack.c.l.b16 %v663
        %v956 = vunpack.c.l.b16 %v664
        %v957 = vunpack.c.l.b16 %v665
        %v958 = vunpack.c.l.b16 %v666
        %v959 = vunpack.c.l.b16 %v667
        %v960 = vunpack.c.l.b16 %v668
        %v961 = vunpack.c.l.b16 %v669
        %v962 = vunpack.c.l.b16 %v670
        %v963 = vunpack.c.l.b16 %v671
        %v964 = vunpack.c.l.b16 %v672
        %v965 = vunpack.c.l.b16 %v673
        %v966 = vunpack.c.l.b16 %v674
        %v967 = vunpack.c.l.b16 %v675
        %v968 = vunpack.c.l.b16 %v676
        %v969 = vunpack.c.l.b16 %v677
        %v970 = vunpack.c.l.b16 %v678
        %v971 = vunpack.c.l.b16 %v679
        %v972 = vunpack.c.l.b16 %v680
        %v973 = vunpack.c.l.b16 %v681
        %v974 = vunpack.c.l.b16 %v682
        %v975 = vunpack.c.l.b16 %v683
        %v976 = vunpack.c.l.b16 %v684
        %v977 = vunpack.c.l.b16 %v685
        %v978 = vunpack.c.l.b16 %v686
        %v979 = vunpack.c.l.b16 %v687
        %v980 = vunpack.c.l.b16 %v688
        %v981 = vunpack.c.l.b16 %v689
        %v982 = vunpack.c.l.b16 %v690
        %v983 = vunpack.c.l.b16 %v691
        %v984 = vunpack.c.l.b16 %v692
        %v985 = vunpack.c.l.b16 %v693
        %v986 = vunpack.c.l.b16 %v694
        %v987 = vunpack.c.l.b16 %v695
        %v988 = vunpack.c.l.b16 %v696
        %v989 = vunpack.c.l.b16 %v697
        %v990 = vunpack.c.l.b16 %v698
        %v991 = vunpack.c.l.b16 %v699
        %v992 = vunpack.c.l.b16 %v700
        %v993 = vunpack.c.l.b16 %v701
        %v994 = vunpack.c.l.b16 %v702
        %v995 = vunpack.c.l.b16 %v703
        %v996 = vunpack.c.l.b16 %v704
        %v997 = vunpack.c.l.b16 %v705
        %v998 = vunpack.c.l.b16 %v706
        %v999 = vunpack.c.l.b16 %v707
        %v1000 = vunpack.c.l.b16 %v708
        %v1001 = vunpack.c.l.b16 %v709
        %v1002 = vunpack.c.l.b16 %v710
        %v1003 = vunpack.c.l.b16 %v711
        %v1004 = vunpack.c.l.b16 %v712
        %v1005 = vunpack.c.l.b16 %v713
        %v1006 = vunpack.c.l.b16 %v714
        %v1007 = vunpack.c.l.b16 %v715
        %v1008 = vunpack.c.l.b16 %v716
        %v1009 = vunpack.c.l.b16 %v717
        %v1010 = vunpack.c.l.b16 %v718
        %v1011 = vunpack.c.l.b16 %v719
        %v1012 = vunpack.c.l.b16 %v720
        %v1013 = vunpack.c.l.b16 %v721
        %v1014 = vpack.c.b16 %v871, %v870
        %v1015 = vpack.c.b16 %v873, %v872
        %v1016 = vpack.c.b16 %v875, %v874
        %v1017 = vpack.c.b16 %v877, %v876
        %v1018 = vpack.c.b16 %v879, %v878
        %v1019 = vpack.c.b16 %v881, %v880
        %v1020 = vpack.c.b16 %v883, %v882
        %v1021 = vpack.c.b16 %v885, %v884
        %v1022 = vpack.c.b16 %v887, %v886
        %v1023 = vpack.c.b16 %v889, %v888
        %v1024 = vpack.c.b16 %v891, %v890
        %v1025 = vpack.c.b16 %v893, %v892
        %v1026 = vpack.c.b16 %v895, %v894
        %v1027 = vpack.c.b16 %v897, %v896
        %v1028 = vpack.c.b16 %v899, %v898
        %v1029 = vpack.c.b16 %v901, %v900
        %v1030 = vpack.c.b16 %v903, %v902
        %v1031 = vpack.c.b16 %v905, %v904
        %v1032 = vpack.c.b16 %v907, %v906
        %v1033 = vpack.c.b16 %v909, %v908
        %v1034 = vpack.c.b16 %v911, %v910
        %v1035 = vpack.c.b16 %v913, %v912
        %v1036 = vpack.c.b16 %v915, %v914
        %v1037 = vpack.c.b16 %v917, %v916
        %v1038 = vpack.c.b16 %v919, %v918
        %v1039 = vpack.c.b16 %v921, %v920
        %v1040 = vpack.c.b16 %v923, %v922
        %v1041 = vpack.c.b16 %v925, %v924
        %v1042 = vpack.c.b16 %v927, %v926
        %v1043 = vpack.c.b16 %v929, %v928
        %v1044 = vpack.c.b16 %v931, %v930
        %v1045 = vpack.c.b16 %v933, %v932
        %v1046 = vpack.c.b16 %v935, %v934
        %v1047 = vpack.c.b16 %v937, %v936
        %v1048 = vpack.c.b16 %v939, %v938
        %v1049 = vpack.c.b16 %v941, %v940
        %v1050 = vpack.c.b16 %v943, %v942
        %v1051 = vpack.c.b16 %v945, %v944
        %v1052 = vpack.c.b16 %v947, %v946
        %v1053 = vpack.c.b16 %v949, %v948
        %v1054 = vpack.c.b16 %v951, %v950
        %v1055 = vpack.c.b16 %v953, %v952
        %v1056 = vpack.c.b16 %v955, %v954
        %v1057 = vpack.c.b16 %v957, %v956
        %v1058 = vpack.c.b16 %v959, %v958
        %v1059 = vpack.c.b16 %v961, %v960
        %v1060 = vpack.c.b16 %v963, %v962
        %v1061 = vpack.c.b16 %v965, %v964
        %v1062 = vpack.c.b16 %v967, %v966
        %v1063 = vpack.c.b16 %v969, %v968
        %v1064 = vpack.c.b16 %v971, %v970
        %v1065 = vpack.c.b16 %v973, %v972
        %v1066 = vpack.c.b16 %v975, %v974
        %v1067 = vpack.c.b16 %v977, %v976
        %v1068 = vpack.c.b16 %v979, %v978
        %v1069 = vpack.c.b16 %v981, %v980
        %v1070 = vpack.c.b16 %v983, %v982
        %v1071 = vpack.c.b16 %v985, %v984
        %v1072 = vpack.c.b16 %v987, %v986
        %v1073 = vpack.c.b16 %v989, %v988
        %v1074 = vpack.c.b16 %v991, %v990
        %v1075 = vpack.c.b16 %v993, %v992
        %v1076 = vpack.c.b16 %v995, %v994
        %v1077 = vpack.c.b16 %v997, %v996
        %v1078 = vpack.c.b16 %v999, %v998
        %v1079 = vpack.c.b16 %v1001, %v1000
        %v1080 = vpack.c.b16 %v1003, %v1002
        %v1081 = vpack.c.b16 %v1005, %v1004
        %v1082 = vpack.c.b16 %v1007, %v1006
        %v1083 = vpack.c.b16 %v1009, %v1008
        %v1084 = vpack.c.b16 %v1011, %v1010
        %v1085 = vpack.c.b16 %v1013, %v1012
        %1158 = vmatpush.bf16.msra.mxu0 %v1021
        %1159 = vmatpush.bf16.msra.mxu0 %v1020
        %1160 = vmatpush.bf16.msra.mxu0 %v1019
        %1161 = vmatpush.bf16.msra.mxu0 %v1018
        %1162 = vmatpush.bf16.msra.mxu0 %v1017
        %1163 = vmatpush.bf16.msra.mxu0 %v1016
        %1164 = vmatpush.bf16.msra.mxu0 %v1015
        %1165 = vmatpush.bf16.msra.mxu0 %v1014
        %1166 = vmatmul.bf16.gmra.mxu0 %v450
        %v1167 = vpop.f32.mrf.mxu0
        %v1168 = vadd.f32 %v724, %v1167
        %v1169 = vpop.f32.mrf.mxu0
        %v1170 = vadd.f32 %v724, %v1169
        %1171 = vmatmul.bf16.gmra.mxu0 %v451
        %v1172 = vpop.f32.mrf.mxu0
        %v1173 = vadd.f32 %v724, %v1172
        %v1174 = vpop.f32.mrf.mxu0
        %v1175 = vadd.f32 %v724, %v1174
        %1176 = vmatmul.bf16.gmra.mxu0 %v452
        %v1177 = vpop.f32.mrf.mxu0
        %v1178 = vadd.f32 %v724, %v1177
        %v1179 = vpop.f32.mrf.mxu0
        %v1180 = vadd.f32 %v724, %v1179
        %1181 = vmatmul.bf16.gmra.mxu0 %v453
        %v1182 = vpop.f32.mrf.mxu0
        %v1183 = vadd.f32 %v724, %v1182
        %v1184 = vpop.f32.mrf.mxu0
        %v1185 = vadd.f32 %v724, %v1184
        %1186 = vmatmul.bf16.gmra.mxu0 %v454
        %v1187 = vpop.f32.mrf.mxu0
        %v1188 = vadd.f32 %v724, %v1187
        %v1189 = vpop.f32.mrf.mxu0
        %v1190 = vadd.f32 %v724, %v1189
        %1191 = vmatmul.bf16.gmra.mxu0 %v455
        %v1192 = vpop.f32.mrf.mxu0
        %v1193 = vadd.f32 %v724, %v1192
        %v1194 = vpop.f32.mrf.mxu0
        %v1195 = vadd.f32 %v724, %v1194
        %1196 = vmatmul.bf16.gmra.mxu0 %v456
        %v1197 = vpop.f32.mrf.mxu0
        %v1198 = vadd.f32 %v724, %v1197
        %v1199 = vpop.f32.mrf.mxu0
        %v1200 = vadd.f32 %v724, %v1199
        %1201 = vmatmul.bf16.gmra.mxu0 %v457
        %v1202 = vpop.f32.mrf.mxu0
        %v1203 = vadd.f32 %v724, %v1202
        %v1204 = vpop.f32.mrf.mxu0
        %v1205 = vadd.f32 %v724, %v1204
        %1206 = vdwg.mxu0
        %1207 = vmatpush.bf16.msra.mxu0 %v1029
        %1208 = vmatpush.bf16.msra.mxu0 %v1028
        %1209 = vmatpush.bf16.msra.mxu0 %v1027
        %1210 = vmatpush.bf16.msra.mxu0 %v1026
        %1211 = vmatpush.bf16.msra.mxu0 %v1025
        %1212 = vmatpush.bf16.msra.mxu0 %v1024
        %1213 = vmatpush.bf16.msra.mxu0 %v1023
        %1214 = vmatpush.bf16.msra.mxu0 %v1022
        %1215 = vmatmul.bf16.gmra.mxu0 %v482
        %v1216 = vpop.f32.mrf.mxu0
        %v1217 = vadd.f32 %v1168, %v1216
        %v1218 = vpop.f32.mrf.mxu0
        %v1219 = vadd.f32 %v1170, %v1218
        %1220 = vmatmul.bf16.gmra.mxu0 %v483
        %v1221 = vpop.f32.mrf.mxu0
        %v1222 = vadd.f32 %v1173, %v1221
        %v1223 = vpop.f32.mrf.mxu0
        %v1224 = vadd.f32 %v1175, %v1223
        %1225 = vmatmul.bf16.gmra.mxu0 %v484
        %v1226 = vpop.f32.mrf.mxu0
        %v1227 = vadd.f32 %v1178, %v1226
        %v1228 = vpop.f32.mrf.mxu0
        %v1229 = vadd.f32 %v1180, %v1228
        %1230 = vmatmul.bf16.gmra.mxu0 %v485
        %v1231 = vpop.f32.mrf.mxu0
        %v1232 = vadd.f32 %v1183, %v1231
        %v1233 = vpop.f32.mrf.mxu0
        %v1234 = vadd.f32 %v1185, %v1233
        %1235 = vmatmul.bf16.gmra.mxu0 %v486
        %v1236 = vpop.f32.mrf.mxu0
        %v1237 = vadd.f32 %v1188, %v1236
        %v1238 = vpop.f32.mrf.mxu0
        %v1239 = vadd.f32 %v1190, %v1238
        %1240 = vmatmul.bf16.gmra.mxu0 %v487
        %v1241 = vpop.f32.mrf.mxu0
        %v1242 = vadd.f32 %v1193, %v1241
        %v1243 = vpop.f32.mrf.mxu0
        %v1244 = vadd.f32 %v1195, %v1243
        %1245 = vmatmul.bf16.gmra.mxu0 %v488
        %v1246 = vpop.f32.mrf.mxu0
        %v1247 = vadd.f32 %v1198, %v1246
        %v1248 = vpop.f32.mrf.mxu0
        %v1249 = vadd.f32 %v1200, %v1248
        %1250 = vmatmul.bf16.gmra.mxu0 %v489
        %v1251 = vpop.f32.mrf.mxu0
        %v1252 = vadd.f32 %v1203, %v1251
        %v1253 = vpop.f32.mrf.mxu0
        %v1254 = vadd.f32 %v1205, %v1253
        %1255 = vdwg.mxu0
        %1256 = vmatpush.bf16.msra.mxu0 %v1037
        %1257 = vmatpush.bf16.msra.mxu0 %v1036
        %1258 = vmatpush.bf16.msra.mxu0 %v1035
        %1259 = vmatpush.bf16.msra.mxu0 %v1034
        %1260 = vmatpush.bf16.msra.mxu0 %v1033
        %1261 = vmatpush.bf16.msra.mxu0 %v1032
        %1262 = vmatpush.bf16.msra.mxu0 %v1031
        %1263 = vmatpush.bf16.msra.mxu0 %v1030
        %1264 = vmatmul.bf16.gmra.mxu0 %v514
        %v1265 = vpop.f32.mrf.mxu0
        %v1266 = vadd.f32 %v1217, %v1265
        %v1267 = vpop.f32.mrf.mxu0
        %v1268 = vadd.f32 %v1219, %v1267
        %1269 = vmatmul.bf16.gmra.mxu0 %v515
        %v1270 = vpop.f32.mrf.mxu0
        %v1271 = vadd.f32 %v1222, %v1270
        %v1272 = vpop.f32.mrf.mxu0
        %v1273 = vadd.f32 %v1224, %v1272
        %1274 = vmatmul.bf16.gmra.mxu0 %v516
        %v1275 = vpop.f32.mrf.mxu0
        %v1276 = vadd.f32 %v1227, %v1275
        %v1277 = vpop.f32.mrf.mxu0
        %v1278 = vadd.f32 %v1229, %v1277
        %1279 = vmatmul.bf16.gmra.mxu0 %v517
        %v1280 = vpop.f32.mrf.mxu0
        %v1281 = vadd.f32 %v1232, %v1280
        %v1282 = vpop.f32.mrf.mxu0
        %v1283 = vadd.f32 %v1234, %v1282
        %1284 = vmatmul.bf16.gmra.mxu0 %v518
        %v1285 = vpop.f32.mrf.mxu0
        %v1286 = vadd.f32 %v1237, %v1285
        %v1287 = vpop.f32.mrf.mxu0
        %v1288 = vadd.f32 %v1239, %v1287
        %1289 = vmatmul.bf16.gmra.mxu0 %v519
        %v1290 = vpop.f32.mrf.mxu0
        %v1291 = vadd.f32 %v1242, %v1290
        %v1292 = vpop.f32.mrf.mxu0
        %v1293 = vadd.f32 %v1244, %v1292
        %1294 = vmatmul.bf16.gmra.mxu0 %v520
        %v1295 = vpop.f32.mrf.mxu0
        %v1296 = vadd.f32 %v1247, %v1295
        %v1297 = vpop.f32.mrf.mxu0
        %v1298 = vadd.f32 %v1249, %v1297
        %1299 = vmatmul.bf16.gmra.mxu0 %v521
        %v1300 = vpop.f32.mrf.mxu0
        %v1301 = vadd.f32 %v1252, %v1300
        %v1302 = vpop.f32.mrf.mxu0
        %v1303 = vadd.f32 %v1254, %v1302
        %1304 = vdwg.mxu0
        %1305 = vmatpush.bf16.msra.mxu0 %v1045
        %1306 = vmatpush.bf16.msra.mxu0 %v1044
        %1307 = vmatpush.bf16.msra.mxu0 %v1043
        %1308 = vmatpush.bf16.msra.mxu0 %v1042
        %1309 = vmatpush.bf16.msra.mxu0 %v1041
        %1310 = vmatpush.bf16.msra.mxu0 %v1040
        %1311 = vmatpush.bf16.msra.mxu0 %v1039
        %1312 = vmatpush.bf16.msra.mxu0 %v1038
        %1313 = vmatmul.bf16.gmra.mxu0 %v452
        %v1314 = vpop.f32.mrf.mxu0
        %v1315 = vadd.f32 %v1266, %v1314
        %v1316 = vpop.f32.mrf.mxu0
        %v1317 = vadd.f32 %v1268, %v1316
        %1318 = vmatmul.bf16.gmra.mxu0 %v453
        %v1319 = vpop.f32.mrf.mxu0
        %v1320 = vadd.f32 %v1271, %v1319
        %v1321 = vpop.f32.mrf.mxu0
        %v1322 = vadd.f32 %v1273, %v1321
        %1323 = vmatmul.bf16.gmra.mxu0 %v454
        %v1324 = vpop.f32.mrf.mxu0
        %v1325 = vadd.f32 %v1276, %v1324
        %v1326 = vpop.f32.mrf.mxu0
        %v1327 = vadd.f32 %v1278, %v1326
        %1328 = vmatmul.bf16.gmra.mxu0 %v455
        %v1329 = vpop.f32.mrf.mxu0
        %v1330 = vadd.f32 %v1281, %v1329
        %v1331 = vpop.f32.mrf.mxu0
        %v1332 = vadd.f32 %v1283, %v1331
        %1333 = vmatmul.bf16.gmra.mxu0 %v456
        %v1334 = vpop.f32.mrf.mxu0
        %v1335 = vadd.f32 %v1286, %v1334
        %v1336 = vpop.f32.mrf.mxu0
        %v1337 = vadd.f32 %v1288, %v1336
        %1338 = vmatmul.bf16.gmra.mxu0 %v457
        %v1339 = vpop.f32.mrf.mxu0
        %v1340 = vadd.f32 %v1291, %v1339
        %v1341 = vpop.f32.mrf.mxu0
        %v1342 = vadd.f32 %v1293, %v1341
        %1343 = vmatmul.bf16.gmra.mxu0 %v534
        %v1344 = vpop.f32.mrf.mxu0
        %v1345 = vadd.f32 %v1296, %v1344
        %v1346 = vpop.f32.mrf.mxu0
        %v1347 = vadd.f32 %v1298, %v1346
        %1348 = vmatmul.bf16.gmra.mxu0 %v535
        %v1349 = vpop.f32.mrf.mxu0
        %v1350 = vadd.f32 %v1301, %v1349
        %v1351 = vpop.f32.mrf.mxu0
        %v1352 = vadd.f32 %v1303, %v1351
        %1353 = vdwg.mxu0
        %1354 = vmatpush.bf16.msra.mxu0 %v1053
        %1355 = vmatpush.bf16.msra.mxu0 %v1052
        %1356 = vmatpush.bf16.msra.mxu0 %v1051
        %1357 = vmatpush.bf16.msra.mxu0 %v1050
        %1358 = vmatpush.bf16.msra.mxu0 %v1049
        %1359 = vmatpush.bf16.msra.mxu0 %v1048
        %1360 = vmatpush.bf16.msra.mxu0 %v1047
        %1361 = vmatpush.bf16.msra.mxu0 %v1046
        %1362 = vmatmul.bf16.gmra.mxu0 %v484
        %v1363 = vpop.f32.mrf.mxu0
        %v1364 = vadd.f32 %v1315, %v1363
        %v1365 = vpop.f32.mrf.mxu0
        %v1366 = vadd.f32 %v1317, %v1365
        %1367 = vmatmul.bf16.gmra.mxu0 %v485
        %v1368 = vpop.f32.mrf.mxu0
        %v1369 = vadd.f32 %v1320, %v1368
        %v1370 = vpop.f32.mrf.mxu0
        %v1371 = vadd.f32 %v1322, %v1370
        %1372 = vmatmul.bf16.gmra.mxu0 %v486
        %v1373 = vpop.f32.mrf.mxu0
        %v1374 = vadd.f32 %v1325, %v1373
        %v1375 = vpop.f32.mrf.mxu0
        %v1376 = vadd.f32 %v1327, %v1375
        %1377 = vmatmul.bf16.gmra.mxu0 %v487
        %v1378 = vpop.f32.mrf.mxu0
        %v1379 = vadd.f32 %v1330, %v1378
        %v1380 = vpop.f32.mrf.mxu0
        %v1381 = vadd.f32 %v1332, %v1380
        %1382 = vmatmul.bf16.gmra.mxu0 %v488
        %v1383 = vpop.f32.mrf.mxu0
        %v1384 = vadd.f32 %v1335, %v1383
        %v1385 = vpop.f32.mrf.mxu0
        %v1386 = vadd.f32 %v1337, %v1385
        %1387 = vmatmul.bf16.gmra.mxu0 %v489
        %v1388 = vpop.f32.mrf.mxu0
        %v1389 = vadd.f32 %v1340, %v1388
        %v1390 = vpop.f32.mrf.mxu0
        %v1391 = vadd.f32 %v1342, %v1390
        %1392 = vmatmul.bf16.gmra.mxu0 %v542
        %v1393 = vpop.f32.mrf.mxu0
        %v1394 = vadd.f32 %v1345, %v1393
        %v1395 = vpop.f32.mrf.mxu0
        %v1396 = vadd.f32 %v1347, %v1395
        %1397 = vmatmul.bf16.gmra.mxu0 %v543
        %v1398 = vpop.f32.mrf.mxu0
        %v1399 = vadd.f32 %v1350, %v1398
        %v1400 = vpop.f32.mrf.mxu0
        %v1401 = vadd.f32 %v1352, %v1400
        %1402 = vdwg.mxu0
        %1403 = vmatpush.bf16.msra.mxu0 %v1061
        %1404 = vmatpush.bf16.msra.mxu0 %v1060
        %1405 = vmatpush.bf16.msra.mxu0 %v1059
        %1406 = vmatpush.bf16.msra.mxu0 %v1058
        %1407 = vmatpush.bf16.msra.mxu0 %v1057
        %1408 = vmatpush.bf16.msra.mxu0 %v1056
        %1409 = vmatpush.bf16.msra.mxu0 %v1055
        %1410 = vmatpush.bf16.msra.mxu0 %v1054
        %1411 = vmatmul.bf16.gmra.mxu0 %v516
        %v1412 = vpop.f32.mrf.mxu0
        %v1413 = vadd.f32 %v1364, %v1412
        %v1414 = vpop.f32.mrf.mxu0
        %v1415 = vadd.f32 %v1366, %v1414
        %1416 = vmatmul.bf16.gmra.mxu0 %v517
        %v1417 = vpop.f32.mrf.mxu0
        %v1418 = vadd.f32 %v1369, %v1417
        %v1419 = vpop.f32.mrf.mxu0
        %v1420 = vadd.f32 %v1371, %v1419
        %1421 = vmatmul.bf16.gmra.mxu0 %v518
        %v1422 = vpop.f32.mrf.mxu0
        %v1423 = vadd.f32 %v1374, %v1422
        %v1424 = vpop.f32.mrf.mxu0
        %v1425 = vadd.f32 %v1376, %v1424
        %1426 = vmatmul.bf16.gmra.mxu0 %v519
        %v1427 = vpop.f32.mrf.mxu0
        %v1428 = vadd.f32 %v1379, %v1427
        %v1429 = vpop.f32.mrf.mxu0
        %v1430 = vadd.f32 %v1381, %v1429
        %1431 = vmatmul.bf16.gmra.mxu0 %v520
        %v1432 = vpop.f32.mrf.mxu0
        %v1433 = vadd.f32 %v1384, %v1432
        %v1434 = vpop.f32.mrf.mxu0
        %v1435 = vadd.f32 %v1386, %v1434
        %1436 = vmatmul.bf16.gmra.mxu0 %v521
        %v1437 = vpop.f32.mrf.mxu0
        %v1438 = vadd.f32 %v1389, %v1437
        %v1439 = vpop.f32.mrf.mxu0
        %v1440 = vadd.f32 %v1391, %v1439
        %1441 = vmatmul.bf16.gmra.mxu0 %v550
        %v1442 = vpop.f32.mrf.mxu0
        %v1443 = vadd.f32 %v1394, %v1442
        %v1444 = vpop.f32.mrf.mxu0
        %v1445 = vadd.f32 %v1396, %v1444
        %1446 = vmatmul.bf16.gmra.mxu0 %v551
        %v1447 = vpop.f32.mrf.mxu0
        %v1448 = vadd.f32 %v1399, %v1447
        %v1449 = vpop.f32.mrf.mxu0
        %v1450 = vadd.f32 %v1401, %v1449
        %1451 = vdwg.mxu0
        %1452 = vmatpush.bf16.msra.mxu0 %v1069
        %1453 = vmatpush.bf16.msra.mxu0 %v1068
        %1454 = vmatpush.bf16.msra.mxu0 %v1067
        %1455 = vmatpush.bf16.msra.mxu0 %v1066
        %1456 = vmatpush.bf16.msra.mxu0 %v1065
        %1457 = vmatpush.bf16.msra.mxu0 %v1064
        %1458 = vmatpush.bf16.msra.mxu0 %v1063
        %1459 = vmatpush.bf16.msra.mxu0 %v1062
        %1460 = vmatmul.bf16.gmra.mxu0 %v454
        %v1461 = vpop.f32.mrf.mxu0
        %v1462 = vadd.f32 %v1413, %v1461
        %v1463 = vpop.f32.mrf.mxu0
        %v1464 = vadd.f32 %v1415, %v1463
        %1465 = vmatmul.bf16.gmra.mxu0 %v455
        %v1466 = vpop.f32.mrf.mxu0
        %v1467 = vadd.f32 %v1418, %v1466
        %v1468 = vpop.f32.mrf.mxu0
        %v1469 = vadd.f32 %v1420, %v1468
        %1470 = vmatmul.bf16.gmra.mxu0 %v456
        %v1471 = vpop.f32.mrf.mxu0
        %v1472 = vadd.f32 %v1423, %v1471
        %v1473 = vpop.f32.mrf.mxu0
        %v1474 = vadd.f32 %v1425, %v1473
        %1475 = vmatmul.bf16.gmra.mxu0 %v457
        %v1476 = vpop.f32.mrf.mxu0
        %v1477 = vadd.f32 %v1428, %v1476
        %v1478 = vpop.f32.mrf.mxu0
        %v1479 = vadd.f32 %v1430, %v1478
        %1480 = vmatmul.bf16.gmra.mxu0 %v534
        %v1481 = vpop.f32.mrf.mxu0
        %v1482 = vadd.f32 %v1433, %v1481
        %v1483 = vpop.f32.mrf.mxu0
        %v1484 = vadd.f32 %v1435, %v1483
        %1485 = vmatmul.bf16.gmra.mxu0 %v535
        %v1486 = vpop.f32.mrf.mxu0
        %v1487 = vadd.f32 %v1438, %v1486
        %v1488 = vpop.f32.mrf.mxu0
        %v1489 = vadd.f32 %v1440, %v1488
        %1490 = vmatmul.bf16.gmra.mxu0 %v558
        %v1491 = vpop.f32.mrf.mxu0
        %v1492 = vadd.f32 %v1443, %v1491
        %v1493 = vpop.f32.mrf.mxu0
        %v1494 = vadd.f32 %v1445, %v1493
        %1495 = vmatmul.bf16.gmra.mxu0 %v559
        %v1496 = vpop.f32.mrf.mxu0
        %v1497 = vadd.f32 %v1448, %v1496
        %v1498 = vpop.f32.mrf.mxu0
        %v1499 = vadd.f32 %v1450, %v1498
        %1500 = vdwg.mxu0
        %1501 = vmatpush.bf16.msra.mxu0 %v1077
        %1502 = vmatpush.bf16.msra.mxu0 %v1076
        %1503 = vmatpush.bf16.msra.mxu0 %v1075
        %1504 = vmatpush.bf16.msra.mxu0 %v1074
        %1505 = vmatpush.bf16.msra.mxu0 %v1073
        %1506 = vmatpush.bf16.msra.mxu0 %v1072
        %1507 = vmatpush.bf16.msra.mxu0 %v1071
        %1508 = vmatpush.bf16.msra.mxu0 %v1070
        %1509 = vmatmul.bf16.gmra.mxu0 %v486
        %v1510 = vpop.f32.mrf.mxu0
        %v1511 = vadd.f32 %v1462, %v1510
        %v1512 = vpop.f32.mrf.mxu0
        %v1513 = vadd.f32 %v1464, %v1512
        %1514 = vmatmul.bf16.gmra.mxu0 %v487
        %v1515 = vpop.f32.mrf.mxu0
        %v1516 = vadd.f32 %v1467, %v1515
        %v1517 = vpop.f32.mrf.mxu0
        %v1518 = vadd.f32 %v1469, %v1517
        %1519 = vmatmul.bf16.gmra.mxu0 %v488
        %v1520 = vpop.f32.mrf.mxu0
        %v1521 = vadd.f32 %v1472, %v1520
        %v1522 = vpop.f32.mrf.mxu0
        %v1523 = vadd.f32 %v1474, %v1522
        %1524 = vmatmul.bf16.gmra.mxu0 %v489
        %v1525 = vpop.f32.mrf.mxu0
        %v1526 = vadd.f32 %v1477, %v1525
        %v1527 = vpop.f32.mrf.mxu0
        %v1528 = vadd.f32 %v1479, %v1527
        %1529 = vmatmul.bf16.gmra.mxu0 %v542
        %v1530 = vpop.f32.mrf.mxu0
        %v1531 = vadd.f32 %v1482, %v1530
        %v1532 = vpop.f32.mrf.mxu0
        %v1533 = vadd.f32 %v1484, %v1532
        %1534 = vmatmul.bf16.gmra.mxu0 %v543
        %v1535 = vpop.f32.mrf.mxu0
        %v1536 = vadd.f32 %v1487, %v1535
        %v1537 = vpop.f32.mrf.mxu0
        %v1538 = vadd.f32 %v1489, %v1537
        %1539 = vmatmul.bf16.gmra.mxu0 %v566
        %v1540 = vpop.f32.mrf.mxu0
        %v1541 = vadd.f32 %v1492, %v1540
        %v1542 = vpop.f32.mrf.mxu0
        %v1543 = vadd.f32 %v1494, %v1542
        %1544 = vmatmul.bf16.gmra.mxu0 %v567
        %v1545 = vpop.f32.mrf.mxu0
        %v1546 = vadd.f32 %v1497, %v1545
        %v1547 = vpop.f32.mrf.mxu0
        %v1548 = vadd.f32 %v1499, %v1547
        %1549 = vdwg.mxu0
        %1550 = vmatpush.bf16.msra.mxu0 %v1085
        %1551 = vmatpush.bf16.msra.mxu0 %v1084
        %1552 = vmatpush.bf16.msra.mxu0 %v1083
        %1553 = vmatpush.bf16.msra.mxu0 %v1082
        %1554 = vmatpush.bf16.msra.mxu0 %v1081
        %1555 = vmatpush.bf16.msra.mxu0 %v1080
        %1556 = vmatpush.bf16.msra.mxu0 %v1079
        %1557 = vmatpush.bf16.msra.mxu0 %v1078
        %1558 = vmatmul.bf16.gmra.mxu0 %v518
        %v1559 = vpop.f32.mrf.mxu0
        %v1560 = vadd.f32 %v1511, %v1559
        %v1561 = vpop.f32.mrf.mxu0
        %v1562 = vadd.f32 %v1513, %v1561
        %1563 = vmatmul.bf16.gmra.mxu0 %v519
        %v1564 = vpop.f32.mrf.mxu0
        %v1565 = vadd.f32 %v1516, %v1564
        %v1566 = vpop.f32.mrf.mxu0
        %v1567 = vadd.f32 %v1518, %v1566
        %1568 = vmatmul.bf16.gmra.mxu0 %v520
        %v1569 = vpop.f32.mrf.mxu0
        %v1570 = vadd.f32 %v1521, %v1569
        %v1571 = vpop.f32.mrf.mxu0
        %v1572 = vadd.f32 %v1523, %v1571
        %1573 = vmatmul.bf16.gmra.mxu0 %v521
        %v1574 = vpop.f32.mrf.mxu0
        %v1575 = vadd.f32 %v1526, %v1574
        %v1576 = vpop.f32.mrf.mxu0
        %v1577 = vadd.f32 %v1528, %v1576
        %1578 = vmatmul.bf16.gmra.mxu0 %v550
        %v1579 = vpop.f32.mrf.mxu0
        %v1580 = vadd.f32 %v1531, %v1579
        %v1581 = vpop.f32.mrf.mxu0
        %v1582 = vadd.f32 %v1533, %v1581
        %1583 = vmatmul.bf16.gmra.mxu0 %v551
        %v1584 = vpop.f32.mrf.mxu0
        %v1585 = vadd.f32 %v1536, %v1584
        %v1586 = vpop.f32.mrf.mxu0
        %v1587 = vadd.f32 %v1538, %v1586
        %1588 = vmatmul.bf16.gmra.mxu0 %v574
        %v1589 = vpop.f32.mrf.mxu0
        %v1590 = vadd.f32 %v1541, %v1589
        %v1591 = vpop.f32.mrf.mxu0
        %v1592 = vadd.f32 %v1543, %v1591
        %1593 = vmatmul.bf16.gmra.mxu0 %v575
        %v1594 = vpop.f32.mrf.mxu0
        %v1595 = vadd.f32 %v1546, %v1594
        %v1596 = vpop.f32.mrf.mxu0
        %v1597 = vadd.f32 %v1548, %v1596
        %1598 = vdwg.mxu0
        %1599 = vst [vmem:[%s177] sm:$0xff] %v1560
        %1600 = vst [vmem:[%s177 + $0x8] sm:$0xff] %v1562
        %1601 = vst [vmem:[%s177 + $0x10] sm:$0xff] %v1565
        %1602 = vst [vmem:[%s177 + $0x18] sm:$0xff] %v1567
        %1603 = vst [vmem:[%s177 + $0x20] sm:$0xff] %v1570
        %1604 = vst [vmem:[%s177 + $0x28] sm:$0xff] %v1572
        %1605 = vst [vmem:[%s177 + $0x30] sm:$0xff] %v1575
        %1606 = vst [vmem:[%s177 + $0x38] sm:$0xff] %v1577
        %1607 = vst [vmem:[%s177 + $0x40] sm:$0xff] %v1580
        %1608 = vst [vmem:[%s177 + $0x48] sm:$0xff] %v1582
        %1609 = vst [vmem:[%s177 + $0x50] sm:$0xff] %v1585
        %1610 = vst [vmem:[%s177 + $0x58] sm:$0xff] %v1587
        %1611 = vst [vmem:[%s177 + $0x60] sm:$0xff] %v1590
        %1612 = vst [vmem:[%s177 + $0x68] sm:$0xff] %v1592
        %1613 = vst [vmem:[%s177 + $0x70] sm:$0xff] %v1595
        %1614 = vst [vmem:[%s177 + $0x78] sm:$0xff] %v1597
        %s1615 = sand.u32 %s107, 1
        %s1616 = scalar_lea.sflag [#allocation3], %s1615
        %s1617 = sand.u32 %s107, 1
        %s1618 = smul.addr %s1617, 128
        %s1619 = scalar_lea.vmem [#allocation2], %s1618
        // Predicated region
        $region33: #{tpu_custom_call.1} parent=31 // pred_check
          %p1620 = pneg %p117
        $region34: #{tpu_custom_call.1} parent=31 // pred_check_branch
          %1622 = sbr.rel (%p1620) target = $region36
        $region35: #{tpu_custom_call.1} parent=31 // pred_region
          %s1623 = smul.u32 8, %s22
          %1625 = vsyncadd %s1616, 0
          %s1626 = smul.addr %s1623, 2
          %s1627 = smul.addr %s21, 32
          %s1628 = sadd.s32 %s1626, %s1627
          %s1629 = smul.addr %s1628, 8
          %s1630 = scalar_lea.hbm %s3, %s1629
          %s1631 = sshll.u32 %s1619, 4
          %s1632 = int_to_ptr.vmem [resolvable:$true] %s1631
          %s1633 = sshll.u32 %s1630, 4
          %s1634 = int_to_ptr.hbm [resolvable:$true] %s1633
          %1639 = dma.vmem_to_hbm [thread:$0]  %s1632, 2048, %s1634, %s1616, 128, 128, 8
        $region36: #{tpu_custom_call.1} parent=31 // pred_fallthru
          _
      $region32: #{tpu_custom_call.1} parent=5 // pred_fallthru
        _
      %p1640 = scmp.le.s32.totalorder 2, %s12
      // Predicated region
      $region37: #{tpu_custom_call.1} parent=5 // pred_check
        %p1641 = pneg %p1640
      $region38: #{tpu_custom_call.1} parent=5 // pred_check_branch
        %1643 = sbr.rel (%p1641) target = $region40
      $region39: #{tpu_custom_call.1} parent=5 // pred_region
        %s1644 = ssub.s32 %s12, 2
        // Predicated region
        $region41: #{tpu_custom_call.1} parent=39 // pred_check
          %p1645 = pneg %p123
        $region42: #{tpu_custom_call.1} parent=39 // pred_check_branch
          %1647 = sbr.rel (%p1645) target = $region44
        $region43: #{tpu_custom_call.1} parent=39 // pred_region
          %s1648 = sand.u32 %s108, 1
          %s1649 = scalar_lea.sflag [#allocation3], %s1648
          %s1650 = sand.u32 %s108, 1
          %s1651 = smul.addr %s1650, 128
          %s1652 = scalar_lea.vmem [#allocation2], %s1651
          %1654 = dma.done %s1649, 2048
        $region44: #{tpu_custom_call.1} parent=39 // pred_fallthru
          _
      $region40: #{tpu_custom_call.1} parent=5 // pred_fallthru
        _
    $region6: #{tpu_custom_call.1} parent=1 // loop_footer
      %s16 = sadd.s32 1, %s12
    $region7: #{tpu_custom_call.1} parent=1 // loop_footer_branch
      %11 = sbr.rel target = $region3
    $region8: #{tpu_custom_call.1} parent=1 // loop_exit
      _
    %1655 = vsyncpa [#allocation3], 1
    %s1656 = scalar_lea.sflag [#allocation3], 1
    %1657 = vsyncpa %s1656, 1

</llo_original>
